<compile_context>
chip_gen: v6e
topology: v6e:2x2x1
jax: 0.10.0
libtpu: 0.0.40
codegen_flags: <defaults>
</compile_context>

<pallas_src>
import functools
import math

import numpy as np
import jax
import jax.numpy as jnp
from jax import lax
from jax.experimental import pallas as pl
from jax.experimental.pallas import tpu as pltpu

# ----------------------------- configuration --------------------------------
B, C, H, W = 2, 6, 16, 16          # has_flow=False => channels == 6
PADDING = 2                        # opt.lossBorderPadding
HW = H * W                         # lane axis: pixels of one image
assert (W & (W - 1)) == 0 and (H & (H - 1)) == 0, (
    "power-of-two fast path only; precompute keep mask host-side otherwise")
LOG2_W = int(math.log2(W))

# weight_dict from parsing the loss string
W_L1_MASK = 1.0
W_MSE_NORMAL = 1.0
W_L1_AO = 0.5
W_MSE_DEPTH = 0.5
W_TL2_NORMAL = 0.2
W_TL1_MASK = 0.1
W_BOUNDED_MASK = 1.0
W_BCE_MASK = 1.0

LOSS_NAMES = [
    ("l1", "mask"),
    ("mse", "normal"),
    ("l1", "ao"),
    ("mse", "depth"),
    ("bounded", "mask"),
    ("bce", "mask"),
]
LOSS_WEIGHTS = [W_L1_MASK, W_MSE_NORMAL, W_L1_AO, W_MSE_DEPTH,
                W_BOUNDED_MASK, W_BCE_MASK]
TEMPORAL_NAMES = [
    ("temp-l2", "normal"),
    ("temp-l1", "mask"),
]
TEMPORAL_WEIGHTS = [W_TL2_NORMAL, W_TL1_MASK]


# ------------------------------- kernel --------------------------------------
def _border_keep_mask():
    """(1, HW) float32 mask: 1 inside, 0 on the PADDING-wide border (static)."""
    lane = lax.broadcasted_iota(jnp.int32, (1, HW), 1)
    h = lane >> LOG2_W
    w = lane & (W - 1)
    keep = ((h >= PADDING) & (h < H - PADDING) &
            (w >= PADDING) & (w < W - PADDING))
    return keep.astype(jnp.float32)


def _normalize3(n):
    """F.normalize along the 3-row channel axis (torch eps=1e-12), via rsqrt."""
    sq = n * n
    ss = sq[0:1] + sq[1:2] + sq[2:3]                     # (1, HW)
    inv = lax.rsqrt(jnp.maximum(ss, 1e-24))              # == 1 / max(||n||,1e-12)
    return n * inv


def _per_batch_rows(gt, pred, prev, keep, include_temporal):
    """Per-pixel integrands (each (1, HW)), pre-scaled so the grand lane-sum
    over all batches equals the per-term mean."""
    inv_n = 1.0 / (B * HW)
    inv_3n = 1.0 / (3.0 * B * HW)

    gt_m = gt[0:1] * keep                 # border-zeroed mask channels
    pred_m = pred[0:1] * keep
    t = gt_m * 0.5 + 0.5                  # BCE target (border pixels -> 0.5)
    mck = jnp.clip(t, 0.0, 1.0) * keep    # clamp-mask with border zeroing folded in

    gt_n = _normalize3(gt[1:4])
    pred_n = _normalize3(pred[1:4])

    rows = []

    # ('l1', 'mask')
    rows.append(jnp.abs(gt_m - pred_m) * inv_n)

    # ('mse', 'normal')
    dn = (gt_n - pred_n) * mck
    dn = dn * dn
    rows.append((dn[0:1] + dn[1:2] + dn[2:3]) * inv_3n)

    # ('l1', 'ao')   (ao = channel 5)
    rows.append(jnp.abs(gt[5:6] - pred[5:6]) * mck * inv_n)

    # ('mse', 'depth')  (depth = channel 4)
    dd = (gt[4:5] - pred[4:5]) * mck
    rows.append(dd * dd * inv_n)

    # ('bounded', 'mask')
    rows.append(jnp.maximum(pred_m * pred_m - 2.0, 0.0) * inv_n)

    # ('bce', 'mask'): F.binary_cross_entropy_with_logits(pred_m*0.5+0.5, t)
    z = pred_m * 0.5 + 0.5
    bce = jnp.maximum(z, 0.0) - z * t + jnp.log(1.0 + jnp.exp(-jnp.abs(z)))
    rows.append(bce * inv_n)

    if include_temporal:
        prev_m = prev[0:1] * keep
        prev_n = _normalize3(prev[1:4])

        # ('temp-l2', 'normal')
        dt = (pred_n - prev_n) * mck
        dt = dt * dt
        rows.append((dt[0:1] + dt[1:2] + dt[2:3]) * inv_3n)

        # ('temp-l1', 'mask')
        rows.append(jnp.abs(pred_m - prev_m) * inv_n)

    return rows


def _loss_body(gt_ref, pred_ref, prev_ref, out_ref, slab_ref, *,
               include_temporal):
    keep = _border_keep_mask()                            # (1, HW)
    weights = LOSS_WEIGHTS + (TEMPORAL_WEIGHTS if include_temporal else [])

    # Static Python loop over the (tiny) batch: per-batch partial integrands
    # are summed element-wise before the single fused reduce.
    acc_rows = None
    for b in range(B):
        gt = gt_ref[b]                                    # (C, HW)
        pred = pred_ref[b]
        prev = prev_ref[b] if include_temporal else None
        rows_b = _per_batch_rows(gt, pred, prev, keep, include_temporal)
        if acc_rows is None:
            acc_rows = rows_b
        else:
            acc_rows = [a + r for a, r in zip(acc_rows, rows_b)]

    # weighted generator loss as one more full-width row
    gen = acc_rows[0] * weights[0]
    for r, wgt in zip(acc_rows[1:], weights[1:]):
        gen = gen + r * wgt
    acc_rows.append(gen)

    # Fixed-sublane stores into the scratch slab (vst slot; no concat relayout),
    # then ONE fused lane reduce over the whole slab.
    for i, r in enumerate(acc_rows):
        slab_ref[i:i + 1, :] = r
    vals = jnp.sum(slab_ref[...], axis=1, keepdims=True)  # (n_out, 1)
    out_ref[...] = jnp.broadcast_to(vals, out_ref.shape)  # one lane-dense store


def _make_kernel(include_temporal):
    if include_temporal:
        def kernel(gt_ref, pred_ref, prev_ref, out_ref, slab_ref):
            _loss_body(gt_ref, pred_ref, prev_ref, out_ref, slab_ref,
                       include_temporal=True)
    else:
        def kernel(gt_ref, pred_ref, out_ref, slab_ref):
            _loss_body(gt_ref, pred_ref, None, out_ref, slab_ref,
                       include_temporal=False)
    return kernel


@functools.lru_cache(maxsize=None)
def _build_call(include_temporal):
    n_terms = len(LOSS_NAMES) + (len(TEMPORAL_NAMES) if include_temporal else 0)
    n_out = n_terms + 1                       # + generator_loss
    n_in = 3 if include_temporal else 2
    return n_out, pl.pallas_call(
        _make_kernel(include_temporal),
        out_shape=jax.ShapeDtypeStruct((n_out, 128), jnp.float32),
        in_specs=[pl.BlockSpec(memory_space=pltpu.MemorySpace.VMEM)] * n_in,
        out_specs=pl.BlockSpec(memory_space=pltpu.MemorySpace.VMEM),
        scratch_shapes=[pltpu.VMEM((n_out, HW), jnp.float32)],
        cost_estimate=pl.CostEstimate(
            flops=(120 if include_temporal else 80) * B * HW,
            transcendentals=(5 if include_temporal else 4) * B * HW,
            bytes_accessed=n_in * B * C * HW * 4 + n_out * 128 * 4),
    )


# ------------------------------ wrapper ---------------------------------------
def lossnet_sparse_forward(gt, pred, prev_pred_warped=None,
                           no_temporal_loss=False):
    """gt / pred / prev_pred_warped: (B, C, H, W) float32 (NCHW, like PyTorch)."""
    assert gt.shape == (B, C, H, W)
    assert gt.shape == pred.shape
    include_temporal = not no_temporal_loss

    # Free contiguous views — no XLA transpose, no extra HBM round trip.
    inputs = [gt.reshape(B, C, HW).astype(jnp.float32),
              pred.reshape(B, C, HW).astype(jnp.float32)]
    if include_temporal:
        assert prev_pred_warped is not None
        assert prev_pred_warped.shape == gt.shape
        inputs.append(prev_pred_warped.reshape(B, C, HW).astype(jnp.float32))

    names = LOSS_NAMES + (TEMPORAL_NAMES if include_temporal else [])
    n_out, call = _build_call(include_temporal)

    out2d = call(*inputs)

    # Collapsed epilogue: one device slice for the generator loss (kept as a
    # device scalar, mirroring the torch tensor), and ONE host transfer of the
    # whole value column for the per-term dict (mirrors torch .item()).
    generator_loss = out2d[n_out - 1, 0]
    host_vals = np.asarray(jax.device_get(out2d[:, 0]))
    loss_values = {key: host_vals[i] for i, key in enumerate(names)}
    return generator_loss, loss_values


# --------------------------- pure-JAX reference -------------------------------
def _reference(gt, pred, prev, no_temporal_loss=False):
    def pad(img):
        if PADDING == 0:
            return img
        hh = jnp.arange(H)[:, None]
        ww = jnp.arange(W)[None, :]
        keep = ((hh >= PADDING) & (hh < H - PADDING) &
                (ww >= PADDING) & (ww < W - PADDING)).astype(img.dtype)
        return img * keep[None, None]

    gt, pred, prev = pad(gt), pad(pred), pad(prev)

    def split(x):
        return x[:, 0:1], x[:, 1:4], x[:, 4:5], x[:, 5:6]

    def normalize(n):
        norm = jnp.sqrt(jnp.sum(n * n, axis=1, keepdims=True))
        return n / jnp.maximum(norm, 1e-12)

    g_m, g_n, g_d, g_a = split(gt)
    p_m, p_n, p_d, p_a = split(pred)
    v_m, v_n, _, _ = split(prev)
    g_n, p_n, v_n = normalize(g_n), normalize(p_n), normalize(v_n)
    g_mc = jnp.clip(g_m * 0.5 + 0.5, 0.0, 1.0)

    mse = lambda a, b: jnp.mean((a - b) ** 2)
    l1 = lambda a, b: jnp.mean(jnp.abs(a - b))

    terms = {
        ("l1", "mask"): l1(g_m, p_m),
        ("mse", "normal"): mse(g_n * g_mc, p_n * g_mc),
        ("l1", "ao"): l1(g_a * g_mc, p_a * g_mc),
        ("mse", "depth"): mse(g_d * g_mc, p_d * g_mc),
        ("bounded", "mask"): jnp.mean(jnp.maximum(0.0, p_m * p_m - 2.0)),
        ("bce", "mask"): jnp.mean(
            jnp.maximum(p_m * 0.5 + 0.5, 0.0)
            - (p_m * 0.5 + 0.5) * (g_m * 0.5 + 0.5)
            + jnp.log(1.0 + jnp.exp(-jnp.abs(p_m * 0.5 + 0.5)))),
        ("temp-l2", "normal"): mse(p_n * g_mc, v_n * g_mc),
        ("temp-l1", "mask"): l1(p_m, v_m),
    }
    weights = {
        ("l1", "mask"): W_L1_MASK, ("mse", "normal"): W_MSE_NORMAL,
        ("l1", "ao"): W_L1_AO, ("mse", "depth"): W_MSE_DEPTH,
        ("bounded", "mask"): W_BOUNDED_MASK, ("bce", "mask"): W_BCE_MASK,
        ("temp-l2", "normal"): W_TL2_NORMAL, ("temp-l1", "mask"): W_TL1_MASK,
    }
    gen = 0.0
    for k, v in terms.items():
        if no_temporal_loss and k[0].startswith("temp"):
            continue
        gen = gen + weights[k] * v
    return gen, terms


# --------------------------------- main ---------------------------------------
if __name__ == "__main__":
    key = jax.random.PRNGKey(0)
    k1, k2, k3 = jax.random.split(key, 3)
    gt = jax.random.normal(k1, (B, C, H, W), dtype=jnp.float32)
    pred = jax.random.normal(k2, (B, C, H, W), dtype=jnp.float32)
    prev_pred_warped = jax.random.normal(k3, (B, C, H, W), dtype=jnp.float32)

    for no_temporal in (False, True):
        gen_loss, loss_values = lossnet_sparse_forward(
            gt, pred,
            None if no_temporal else prev_pred_warped,
            no_temporal_loss=no_temporal)
        gen_loss = jax.block_until_ready(gen_loss)
        loss_values = jax.block_until_ready(loss_values)

        ref_gen, ref_terms = _reference(gt, pred, prev_pred_warped,
                                        no_temporal_loss=no_temporal)
        assert jnp.allclose(gen_loss, ref_gen, rtol=1e-5, atol=1e-5), (
            no_temporal, gen_loss, ref_gen)
        for k, v in loss_values.items():
            assert jnp.allclose(v, ref_terms[k], rtol=1e-5, atol=1e-5), (
                no_temporal, k, v, ref_terms[k])

    print("KERNEL_OK")
</pallas_src>

<mosaic_0001>
module attributes {stable_mosaic.version = 11 : i64} {
  func.func @kernel(%arg0: memref<2x6x256xf32, #tpu.memory_space<vmem>>, %arg1: memref<2x6x256xf32, #tpu.memory_space<vmem>>, %arg2: memref<2x6x256xf32, #tpu.memory_space<vmem>>, %arg3: memref<9x128xf32, #tpu.memory_space<vmem>>, %arg4: memref<9x256xf32, #tpu.memory_space<vmem>>) attributes {dimension_semantics = [], scalar_prefetch = 0 : i64, scratch_operands = 1 : i64, tpu.core_type = #tpu.core_type<tc>} {
    %0 = tpu.iota {dimensions = array<i32: 1>} : vector<1x256xi32>
    %c4_i32 = arith.constant 4 : i32
    %1 = vector.broadcast %c4_i32 : i32 to vector<1x256xi32>
    %2 = arith.shrsi %0, %1 : vector<1x256xi32>
    %c15_i32 = arith.constant 15 : i32
    %3 = vector.broadcast %c15_i32 : i32 to vector<1x256xi32>
    %4 = arith.andi %0, %3 : vector<1x256xi32>
    %c2_i32 = arith.constant 2 : i32
    %5 = vector.broadcast %c2_i32 : i32 to vector<1x256xi32>
    %6 = arith.cmpi sge, %2, %5 : vector<1x256xi32>
    %c14_i32 = arith.constant 14 : i32
    %7 = vector.broadcast %c14_i32 : i32 to vector<1x256xi32>
    %8 = arith.cmpi slt, %2, %7 : vector<1x256xi32>
    %9 = arith.andi %6, %8 : vector<1x256xi1>
    %c2_i32_0 = arith.constant 2 : i32
    %10 = vector.broadcast %c2_i32_0 : i32 to vector<1x256xi32>
    %11 = arith.cmpi sge, %4, %10 : vector<1x256xi32>
    %12 = arith.andi %9, %11 : vector<1x256xi1>
    %c14_i32_1 = arith.constant 14 : i32
    %13 = vector.broadcast %c14_i32_1 : i32 to vector<1x256xi32>
    %14 = arith.cmpi slt, %4, %13 : vector<1x256xi32>
    %15 = arith.andi %12, %14 : vector<1x256xi1>
    %16 = arith.extui %15 : vector<1x256xi1> to vector<1x256xi32>
    %17 = arith.sitofp %16 : vector<1x256xi32> to vector<1x256xf32>
    %c0 = arith.constant 0 : index
    %c0_2 = arith.constant 0 : index
    %c0_3 = arith.constant 0 : index
    %18 = vector.load %arg0[%c0, %c0_2, %c0_3] : memref<2x6x256xf32, #tpu.memory_space<vmem>>, vector<1x6x256xf32>
    %19 = vector.shape_cast %18 : vector<1x6x256xf32> to vector<6x256xf32>
    %c0_4 = arith.constant 0 : index
    %c0_5 = arith.constant 0 : index
    %c0_6 = arith.constant 0 : index
    %20 = vector.load %arg1[%c0_4, %c0_5, %c0_6] : memref<2x6x256xf32, #tpu.memory_space<vmem>>, vector<1x6x256xf32>
    %21 = vector.shape_cast %20 : vector<1x6x256xf32> to vector<6x256xf32>
    %c0_7 = arith.constant 0 : index
    %c0_8 = arith.constant 0 : index
    %c0_9 = arith.constant 0 : index
    %22 = vector.load %arg2[%c0_7, %c0_8, %c0_9] : memref<2x6x256xf32, #tpu.memory_space<vmem>>, vector<1x6x256xf32>
    %23 = vector.shape_cast %22 : vector<1x6x256xf32> to vector<6x256xf32>
    %24 = vector.extract_strided_slice %19 {offsets = [0, 0], sizes = [1, 256], strides = [1, 1]} : vector<6x256xf32> to vector<1x256xf32>
    %25 = arith.mulf %24, %17 : vector<1x256xf32>
    %26 = vector.extract_strided_slice %21 {offsets = [0, 0], sizes = [1, 256], strides = [1, 1]} : vector<6x256xf32> to vector<1x256xf32>
    %27 = arith.mulf %26, %17 : vector<1x256xf32>
    %cst = arith.constant 5.000000e-01 : f32
    %28 = vector.broadcast %cst : f32 to vector<1x256xf32>
    %29 = arith.mulf %25, %28 : vector<1x256xf32>
    %cst_10 = arith.constant 5.000000e-01 : f32
    %30 = vector.broadcast %cst_10 : f32 to vector<1x256xf32>
    %31 = arith.addf %29, %30 : vector<1x256xf32>
    %cst_11 = arith.constant 0.000000e+00 : f32
    %cst_12 = arith.constant 1.000000e+00 : f32
    %32 = vector.broadcast %cst_11 : f32 to vector<1x256xf32>
    %33 = arith.maximumf %32, %31 : vector<1x256xf32>
    %34 = vector.broadcast %cst_12 : f32 to vector<1x256xf32>
    %35 = arith.minimumf %34, %33 : vector<1x256xf32>
    %36 = arith.mulf %35, %17 : vector<1x256xf32>
    %37 = vector.extract_strided_slice %19 {offsets = [1, 0], sizes = [3, 256], strides = [1, 1]} : vector<6x256xf32> to vector<3x256xf32>
    %38 = arith.mulf %37, %37 : vector<3x256xf32>
    %39 = vector.extract_strided_slice %38 {offsets = [0, 0], sizes = [1, 256], strides = [1, 1]} : vector<3x256xf32> to vector<1x256xf32>
    %40 = vector.extract_strided_slice %38 {offsets = [1, 0], sizes = [1, 256], strides = [1, 1]} : vector<3x256xf32> to vector<1x256xf32>
    %41 = arith.addf %39, %40 : vector<1x256xf32>
    %42 = vector.extract_strided_slice %38 {offsets = [2, 0], sizes = [1, 256], strides = [1, 1]} : vector<3x256xf32> to vector<1x256xf32>
    %43 = arith.addf %41, %42 : vector<1x256xf32>
    %cst_13 = arith.constant 1.000000e-24 : f32
    %44 = vector.broadcast %cst_13 : f32 to vector<1x256xf32>
    %45 = arith.maximumf %43, %44 : vector<1x256xf32>
    %46 = math.rsqrt %45 : vector<1x256xf32>
    %47 = vector.broadcast %46 : vector<1x256xf32> to vector<3x256xf32>
    %48 = arith.mulf %37, %47 : vector<3x256xf32>
    %49 = vector.extract_strided_slice %21 {offsets = [1, 0], sizes = [3, 256], strides = [1, 1]} : vector<6x256xf32> to vector<3x256xf32>
    %50 = arith.mulf %49, %49 : vector<3x256xf32>
    %51 = vector.extract_strided_slice %50 {offsets = [0, 0], sizes = [1, 256], strides = [1, 1]} : vector<3x256xf32> to vector<1x256xf32>
    %52 = vector.extract_strided_slice %50 {offsets = [1, 0], sizes = [1, 256], strides = [1, 1]} : vector<3x256xf32> to vector<1x256xf32>
    %53 = arith.addf %51, %52 : vector<1x256xf32>
    %54 = vector.extract_strided_slice %50 {offsets = [2, 0], sizes = [1, 256], strides = [1, 1]} : vector<3x256xf32> to vector<1x256xf32>
    %55 = arith.addf %53, %54 : vector<1x256xf32>
    %cst_14 = arith.constant 1.000000e-24 : f32
    %56 = vector.broadcast %cst_14 : f32 to vector<1x256xf32>
    %57 = arith.maximumf %55, %56 : vector<1x256xf32>
    %58 = math.rsqrt %57 : vector<1x256xf32>
    %59 = vector.broadcast %58 : vector<1x256xf32> to vector<3x256xf32>
    %60 = arith.mulf %49, %59 : vector<3x256xf32>
    %61 = arith.subf %25, %27 : vector<1x256xf32>
    %62 = math.absf %61 : vector<1x256xf32>
    %cst_15 = arith.constant 0.001953125 : f32
    %63 = vector.broadcast %cst_15 : f32 to vector<1x256xf32>
    %64 = arith.mulf %62, %63 : vector<1x256xf32>
    %65 = arith.subf %48, %60 : vector<3x256xf32>
    %66 = vector.broadcast %36 : vector<1x256xf32> to vector<3x256xf32>
    %67 = arith.mulf %65, %66 : vector<3x256xf32>
    %68 = arith.mulf %67, %67 : vector<3x256xf32>
    %69 = vector.extract_strided_slice %68 {offsets = [0, 0], sizes = [1, 256], strides = [1, 1]} : vector<3x256xf32> to vector<1x256xf32>
    %70 = vector.extract_strided_slice %68 {offsets = [1, 0], sizes = [1, 256], strides = [1, 1]} : vector<3x256xf32> to vector<1x256xf32>
    %71 = arith.addf %69, %70 : vector<1x256xf32>
    %72 = vector.extract_strided_slice %68 {offsets = [2, 0], sizes = [1, 256], strides = [1, 1]} : vector<3x256xf32> to vector<1x256xf32>
    %73 = arith.addf %71, %72 : vector<1x256xf32>
    %cst_16 = arith.constant 6.51041686E-4 : f32
    %74 = vector.broadcast %cst_16 : f32 to vector<1x256xf32>
    %75 = arith.mulf %73, %74 : vector<1x256xf32>
    %76 = vector.extract_strided_slice %19 {offsets = [5, 0], sizes = [1, 256], strides = [1, 1]} : vector<6x256xf32> to vector<1x256xf32>
    %77 = vector.extract_strided_slice %21 {offsets = [5, 0], sizes = [1, 256], strides = [1, 1]} : vector<6x256xf32> to vector<1x256xf32>
    %78 = arith.subf %76, %77 : vector<1x256xf32>
    %79 = math.absf %78 : vector<1x256xf32>
    %80 = arith.mulf %79, %36 : vector<1x256xf32>
    %cst_17 = arith.constant 0.001953125 : f32
    %81 = vector.broadcast %cst_17 : f32 to vector<1x256xf32>
    %82 = arith.mulf %80, %81 : vector<1x256xf32>
    %83 = vector.extract_strided_slice %19 {offsets = [4, 0], sizes = [1, 256], strides = [1, 1]} : vector<6x256xf32> to vector<1x256xf32>
    %84 = vector.extract_strided_slice %21 {offsets = [4, 0], sizes = [1, 256], strides = [1, 1]} : vector<6x256xf32> to vector<1x256xf32>
    %85 = arith.subf %83, %84 : vector<1x256xf32>
    %86 = arith.mulf %85, %36 : vector<1x256xf32>
    %87 = arith.mulf %86, %86 : vector<1x256xf32>
    %cst_18 = arith.constant 0.001953125 : f32
    %88 = vector.broadcast %cst_18 : f32 to vector<1x256xf32>
    %89 = arith.mulf %87, %88 : vector<1x256xf32>
    %90 = arith.mulf %27, %27 : vector<1x256xf32>
    %cst_19 = arith.constant 2.000000e+00 : f32
    %91 = vector.broadcast %cst_19 : f32 to vector<1x256xf32>
    %92 = arith.subf %90, %91 : vector<1x256xf32>
    %cst_20 = arith.constant 0.000000e+00 : f32
    %93 = vector.broadcast %cst_20 : f32 to vector<1x256xf32>
    %94 = arith.maximumf %92, %93 : vector<1x256xf32>
    %cst_21 = arith.constant 0.001953125 : f32
    %95 = vector.broadcast %cst_21 : f32 to vector<1x256xf32>
    %96 = arith.mulf %94, %95 : vector<1x256xf32>
    %cst_22 = arith.constant 5.000000e-01 : f32
    %97 = vector.broadcast %cst_22 : f32 to vector<1x256xf32>
    %98 = arith.mulf %27, %97 : vector<1x256xf32>
    %cst_23 = arith.constant 5.000000e-01 : f32
    %99 = vector.broadcast %cst_23 : f32 to vector<1x256xf32>
    %100 = arith.addf %98, %99 : vector<1x256xf32>
    %cst_24 = arith.constant 0.000000e+00 : f32
    %101 = vector.broadcast %cst_24 : f32 to vector<1x256xf32>
    %102 = arith.maximumf %100, %101 : vector<1x256xf32>
    %103 = arith.mulf %100, %31 : vector<1x256xf32>
    %104 = arith.subf %102, %103 : vector<1x256xf32>
    %105 = math.absf %100 : vector<1x256xf32>
    %cst_25 = arith.constant 0.000000e+00 : f32
    %106 = vector.broadcast %cst_25 : f32 to vector<1x256xf32>
    %107 = arith.subf %106, %105 : vector<1x256xf32>
    %108 = math.exp %107 : vector<1x256xf32>
    %cst_26 = arith.constant 1.000000e+00 : f32
    %109 = vector.broadcast %cst_26 : f32 to vector<1x256xf32>
    %110 = arith.addf %109, %108 : vector<1x256xf32>
    %111 = math.log %110 : vector<1x256xf32>
    %112 = arith.addf %104, %111 : vector<1x256xf32>
    %cst_27 = arith.constant 0.001953125 : f32
    %113 = vector.broadcast %cst_27 : f32 to vector<1x256xf32>
    %114 = arith.mulf %112, %113 : vector<1x256xf32>
    %115 = vector.extract_strided_slice %23 {offsets = [0, 0], sizes = [1, 256], strides = [1, 1]} : vector<6x256xf32> to vector<1x256xf32>
    %116 = arith.mulf %115, %17 : vector<1x256xf32>
    %117 = vector.extract_strided_slice %23 {offsets = [1, 0], sizes = [3, 256], strides = [1, 1]} : vector<6x256xf32> to vector<3x256xf32>
    %118 = arith.mulf %117, %117 : vector<3x256xf32>
    %119 = vector.extract_strided_slice %118 {offsets = [0, 0], sizes = [1, 256], strides = [1, 1]} : vector<3x256xf32> to vector<1x256xf32>
    %120 = vector.extract_strided_slice %118 {offsets = [1, 0], sizes = [1, 256], strides = [1, 1]} : vector<3x256xf32> to vector<1x256xf32>
    %121 = arith.addf %119, %120 : vector<1x256xf32>
    %122 = vector.extract_strided_slice %118 {offsets = [2, 0], sizes = [1, 256], strides = [1, 1]} : vector<3x256xf32> to vector<1x256xf32>
    %123 = arith.addf %121, %122 : vector<1x256xf32>
    %cst_28 = arith.constant 1.000000e-24 : f32
    %124 = vector.broadcast %cst_28 : f32 to vector<1x256xf32>
    %125 = arith.maximumf %123, %124 : vector<1x256xf32>
    %126 = math.rsqrt %125 : vector<1x256xf32>
    %127 = vector.broadcast %126 : vector<1x256xf32> to vector<3x256xf32>
    %128 = arith.mulf %117, %127 : vector<3x256xf32>
    %129 = arith.subf %60, %128 : vector<3x256xf32>
    %130 = vector.broadcast %36 : vector<1x256xf32> to vector<3x256xf32>
    %131 = arith.mulf %129, %130 : vector<3x256xf32>
    %132 = arith.mulf %131, %131 : vector<3x256xf32>
    %133 = vector.extract_strided_slice %132 {offsets = [0, 0], sizes = [1, 256], strides = [1, 1]} : vector<3x256xf32> to vector<1x256xf32>
    %134 = vector.extract_strided_slice %132 {offsets = [1, 0], sizes = [1, 256], strides = [1, 1]} : vector<3x256xf32> to vector<1x256xf32>
    %135 = arith.addf %133, %134 : vector<1x256xf32>
    %136 = vector.extract_strided_slice %132 {offsets = [2, 0], sizes = [1, 256], strides = [1, 1]} : vector<3x256xf32> to vector<1x256xf32>
    %137 = arith.addf %135, %136 : vector<1x256xf32>
    %cst_29 = arith.constant 6.51041686E-4 : f32
    %138 = vector.broadcast %cst_29 : f32 to vector<1x256xf32>
    %139 = arith.mulf %137, %138 : vector<1x256xf32>
    %140 = arith.subf %27, %116 : vector<1x256xf32>
    %141 = math.absf %140 : vector<1x256xf32>
    %cst_30 = arith.constant 0.001953125 : f32
    %142 = vector.broadcast %cst_30 : f32 to vector<1x256xf32>
    %143 = arith.mulf %141, %142 : vector<1x256xf32>
    %c1 = arith.constant 1 : index
    %c0_31 = arith.constant 0 : index
    %c0_32 = arith.constant 0 : index
    %144 = vector.load %arg0[%c1, %c0_31, %c0_32] : memref<2x6x256xf32, #tpu.memory_space<vmem>>, vector<1x6x256xf32>
    %145 = vector.shape_cast %144 : vector<1x6x256xf32> to vector<6x256xf32>
    %c1_33 = arith.constant 1 : index
    %c0_34 = arith.constant 0 : index
    %c0_35 = arith.constant 0 : index
    %146 = vector.load %arg1[%c1_33, %c0_34, %c0_35] : memref<2x6x256xf32, #tpu.memory_space<vmem>>, vector<1x6x256xf32>
    %147 = vector.shape_cast %146 : vector<1x6x256xf32> to vector<6x256xf32>
    %c1_36 = arith.constant 1 : index
    %c0_37 = arith.constant 0 : index
    %c0_38 = arith.constant 0 : index
    %148 = vector.load %arg2[%c1_36, %c0_37, %c0_38] : memref<2x6x256xf32, #tpu.memory_space<vmem>>, vector<1x6x256xf32>
    %149 = vector.shape_cast %148 : vector<1x6x256xf32> to vector<6x256xf32>
    %150 = vector.extract_strided_slice %145 {offsets = [0, 0], sizes = [1, 256], strides = [1, 1]} : vector<6x256xf32> to vector<1x256xf32>
    %151 = arith.mulf %150, %17 : vector<1x256xf32>
    %152 = vector.extract_strided_slice %147 {offsets = [0, 0], sizes = [1, 256], strides = [1, 1]} : vector<6x256xf32> to vector<1x256xf32>
    %153 = arith.mulf %152, %17 : vector<1x256xf32>
    %cst_39 = arith.constant 5.000000e-01 : f32
    %154 = vector.broadcast %cst_39 : f32 to vector<1x256xf32>
    %155 = arith.mulf %151, %154 : vector<1x256xf32>
    %cst_40 = arith.constant 5.000000e-01 : f32
    %156 = vector.broadcast %cst_40 : f32 to vector<1x256xf32>
    %157 = arith.addf %155, %156 : vector<1x256xf32>
    %cst_41 = arith.constant 0.000000e+00 : f32
    %cst_42 = arith.constant 1.000000e+00 : f32
    %158 = vector.broadcast %cst_41 : f32 to vector<1x256xf32>
    %159 = arith.maximumf %158, %157 : vector<1x256xf32>
    %160 = vector.broadcast %cst_42 : f32 to vector<1x256xf32>
    %161 = arith.minimumf %160, %159 : vector<1x256xf32>
    %162 = arith.mulf %161, %17 : vector<1x256xf32>
    %163 = vector.extract_strided_slice %145 {offsets = [1, 0], sizes = [3, 256], strides = [1, 1]} : vector<6x256xf32> to vector<3x256xf32>
    %164 = arith.mulf %163, %163 : vector<3x256xf32>
    %165 = vector.extract_strided_slice %164 {offsets = [0, 0], sizes = [1, 256], strides = [1, 1]} : vector<3x256xf32> to vector<1x256xf32>
    %166 = vector.extract_strided_slice %164 {offsets = [1, 0], sizes = [1, 256], strides = [1, 1]} : vector<3x256xf32> to vector<1x256xf32>
    %167 = arith.addf %165, %166 : vector<1x256xf32>
    %168 = vector.extract_strided_slice %164 {offsets = [2, 0], sizes = [1, 256], strides = [1, 1]} : vector<3x256xf32> to vector<1x256xf32>
    %169 = arith.addf %167, %168 : vector<1x256xf32>
    %cst_43 = arith.constant 1.000000e-24 : f32
    %170 = vector.broadcast %cst_43 : f32 to vector<1x256xf32>
    %171 = arith.maximumf %169, %170 : vector<1x256xf32>
    %172 = math.rsqrt %171 : vector<1x256xf32>
    %173 = vector.broadcast %172 : vector<1x256xf32> to vector<3x256xf32>
    %174 = arith.mulf %163, %173 : vector<3x256xf32>
    %175 = vector.extract_strided_slice %147 {offsets = [1, 0], sizes = [3, 256], strides = [1, 1]} : vector<6x256xf32> to vector<3x256xf32>
    %176 = arith.mulf %175, %175 : vector<3x256xf32>
    %177 = vector.extract_strided_slice %176 {offsets = [0, 0], sizes = [1, 256], strides = [1, 1]} : vector<3x256xf32> to vector<1x256xf32>
    %178 = vector.extract_strided_slice %176 {offsets = [1, 0], sizes = [1, 256], strides = [1, 1]} : vector<3x256xf32> to vector<1x256xf32>
    %179 = arith.addf %177, %178 : vector<1x256xf32>
    %180 = vector.extract_strided_slice %176 {offsets = [2, 0], sizes = [1, 256], strides = [1, 1]} : vector<3x256xf32> to vector<1x256xf32>
    %181 = arith.addf %179, %180 : vector<1x256xf32>
    %cst_44 = arith.constant 1.000000e-24 : f32
    %182 = vector.broadcast %cst_44 : f32 to vector<1x256xf32>
    %183 = arith.maximumf %181, %182 : vector<1x256xf32>
    %184 = math.rsqrt %183 : vector<1x256xf32>
    %185 = vector.broadcast %184 : vector<1x256xf32> to vector<3x256xf32>
    %186 = arith.mulf %175, %185 : vector<3x256xf32>
    %187 = arith.subf %151, %153 : vector<1x256xf32>
    %188 = math.absf %187 : vector<1x256xf32>
    %cst_45 = arith.constant 0.001953125 : f32
    %189 = vector.broadcast %cst_45 : f32 to vector<1x256xf32>
    %190 = arith.mulf %188, %189 : vector<1x256xf32>
    %191 = arith.subf %174, %186 : vector<3x256xf32>
    %192 = vector.broadcast %162 : vector<1x256xf32> to vector<3x256xf32>
    %193 = arith.mulf %191, %192 : vector<3x256xf32>
    %194 = arith.mulf %193, %193 : vector<3x256xf32>
    %195 = vector.extract_strided_slice %194 {offsets = [0, 0], sizes = [1, 256], strides = [1, 1]} : vector<3x256xf32> to vector<1x256xf32>
    %196 = vector.extract_strided_slice %194 {offsets = [1, 0], sizes = [1, 256], strides = [1, 1]} : vector<3x256xf32> to vector<1x256xf32>
    %197 = arith.addf %195, %196 : vector<1x256xf32>
    %198 = vector.extract_strided_slice %194 {offsets = [2, 0], sizes = [1, 256], strides = [1, 1]} : vector<3x256xf32> to vector<1x256xf32>
    %199 = arith.addf %197, %198 : vector<1x256xf32>
    %cst_46 = arith.constant 6.51041686E-4 : f32
    %200 = vector.broadcast %cst_46 : f32 to vector<1x256xf32>
    %201 = arith.mulf %199, %200 : vector<1x256xf32>
    %202 = vector.extract_strided_slice %145 {offsets = [5, 0], sizes = [1, 256], strides = [1, 1]} : vector<6x256xf32> to vector<1x256xf32>
    %203 = vector.extract_strided_slice %147 {offsets = [5, 0], sizes = [1, 256], strides = [1, 1]} : vector<6x256xf32> to vector<1x256xf32>
    %204 = arith.subf %202, %203 : vector<1x256xf32>
    %205 = math.absf %204 : vector<1x256xf32>
    %206 = arith.mulf %205, %162 : vector<1x256xf32>
    %cst_47 = arith.constant 0.001953125 : f32
    %207 = vector.broadcast %cst_47 : f32 to vector<1x256xf32>
    %208 = arith.mulf %206, %207 : vector<1x256xf32>
    %209 = vector.extract_strided_slice %145 {offsets = [4, 0], sizes = [1, 256], strides = [1, 1]} : vector<6x256xf32> to vector<1x256xf32>
    %210 = vector.extract_strided_slice %147 {offsets = [4, 0], sizes = [1, 256], strides = [1, 1]} : vector<6x256xf32> to vector<1x256xf32>
    %211 = arith.subf %209, %210 : vector<1x256xf32>
    %212 = arith.mulf %211, %162 : vector<1x256xf32>
    %213 = arith.mulf %212, %212 : vector<1x256xf32>
    %cst_48 = arith.constant 0.001953125 : f32
    %214 = vector.broadcast %cst_48 : f32 to vector<1x256xf32>
    %215 = arith.mulf %213, %214 : vector<1x256xf32>
    %216 = arith.mulf %153, %153 : vector<1x256xf32>
    %cst_49 = arith.constant 2.000000e+00 : f32
    %217 = vector.broadcast %cst_49 : f32 to vector<1x256xf32>
    %218 = arith.subf %216, %217 : vector<1x256xf32>
    %cst_50 = arith.constant 0.000000e+00 : f32
    %219 = vector.broadcast %cst_50 : f32 to vector<1x256xf32>
    %220 = arith.maximumf %218, %219 : vector<1x256xf32>
    %cst_51 = arith.constant 0.001953125 : f32
    %221 = vector.broadcast %cst_51 : f32 to vector<1x256xf32>
    %222 = arith.mulf %220, %221 : vector<1x256xf32>
    %cst_52 = arith.constant 5.000000e-01 : f32
    %223 = vector.broadcast %cst_52 : f32 to vector<1x256xf32>
    %224 = arith.mulf %153, %223 : vector<1x256xf32>
    %cst_53 = arith.constant 5.000000e-01 : f32
    %225 = vector.broadcast %cst_53 : f32 to vector<1x256xf32>
    %226 = arith.addf %224, %225 : vector<1x256xf32>
    %cst_54 = arith.constant 0.000000e+00 : f32
    %227 = vector.broadcast %cst_54 : f32 to vector<1x256xf32>
    %228 = arith.maximumf %226, %227 : vector<1x256xf32>
    %229 = arith.mulf %226, %157 : vector<1x256xf32>
    %230 = arith.subf %228, %229 : vector<1x256xf32>
    %231 = math.absf %226 : vector<1x256xf32>
    %cst_55 = arith.constant 0.000000e+00 : f32
    %232 = vector.broadcast %cst_55 : f32 to vector<1x256xf32>
    %233 = arith.subf %232, %231 : vector<1x256xf32>
    %234 = math.exp %233 : vector<1x256xf32>
    %cst_56 = arith.constant 1.000000e+00 : f32
    %235 = vector.broadcast %cst_56 : f32 to vector<1x256xf32>
    %236 = arith.addf %235, %234 : vector<1x256xf32>
    %237 = math.log %236 : vector<1x256xf32>
    %238 = arith.addf %230, %237 : vector<1x256xf32>
    %cst_57 = arith.constant 0.001953125 : f32
    %239 = vector.broadcast %cst_57 : f32 to vector<1x256xf32>
    %240 = arith.mulf %238, %239 : vector<1x256xf32>
    %241 = vector.extract_strided_slice %149 {offsets = [0, 0], sizes = [1, 256], strides = [1, 1]} : vector<6x256xf32> to vector<1x256xf32>
    %242 = arith.mulf %241, %17 : vector<1x256xf32>
    %243 = vector.extract_strided_slice %149 {offsets = [1, 0], sizes = [3, 256], strides = [1, 1]} : vector<6x256xf32> to vector<3x256xf32>
    %244 = arith.mulf %243, %243 : vector<3x256xf32>
    %245 = vector.extract_strided_slice %244 {offsets = [0, 0], sizes = [1, 256], strides = [1, 1]} : vector<3x256xf32> to vector<1x256xf32>
    %246 = vector.extract_strided_slice %244 {offsets = [1, 0], sizes = [1, 256], strides = [1, 1]} : vector<3x256xf32> to vector<1x256xf32>
    %247 = arith.addf %245, %246 : vector<1x256xf32>
    %248 = vector.extract_strided_slice %244 {offsets = [2, 0], sizes = [1, 256], strides = [1, 1]} : vector<3x256xf32> to vector<1x256xf32>
    %249 = arith.addf %247, %248 : vector<1x256xf32>
    %cst_58 = arith.constant 1.000000e-24 : f32
    %250 = vector.broadcast %cst_58 : f32 to vector<1x256xf32>
    %251 = arith.maximumf %249, %250 : vector<1x256xf32>
    %252 = math.rsqrt %251 : vector<1x256xf32>
    %253 = vector.broadcast %252 : vector<1x256xf32> to vector<3x256xf32>
    %254 = arith.mulf %243, %253 : vector<3x256xf32>
    %255 = arith.subf %186, %254 : vector<3x256xf32>
    %256 = vector.broadcast %162 : vector<1x256xf32> to vector<3x256xf32>
    %257 = arith.mulf %255, %256 : vector<3x256xf32>
    %258 = arith.mulf %257, %257 : vector<3x256xf32>
    %259 = vector.extract_strided_slice %258 {offsets = [0, 0], sizes = [1, 256], strides = [1, 1]} : vector<3x256xf32> to vector<1x256xf32>
    %260 = vector.extract_strided_slice %258 {offsets = [1, 0], sizes = [1, 256], strides = [1, 1]} : vector<3x256xf32> to vector<1x256xf32>
    %261 = arith.addf %259, %260 : vector<1x256xf32>
    %262 = vector.extract_strided_slice %258 {offsets = [2, 0], sizes = [1, 256], strides = [1, 1]} : vector<3x256xf32> to vector<1x256xf32>
    %263 = arith.addf %261, %262 : vector<1x256xf32>
    %cst_59 = arith.constant 6.51041686E-4 : f32
    %264 = vector.broadcast %cst_59 : f32 to vector<1x256xf32>
    %265 = arith.mulf %263, %264 : vector<1x256xf32>
    %266 = arith.subf %153, %242 : vector<1x256xf32>
    %267 = math.absf %266 : vector<1x256xf32>
    %cst_60 = arith.constant 0.001953125 : f32
    %268 = vector.broadcast %cst_60 : f32 to vector<1x256xf32>
    %269 = arith.mulf %267, %268 : vector<1x256xf32>
    %270 = arith.addf %64, %190 : vector<1x256xf32>
    %271 = arith.addf %75, %201 : vector<1x256xf32>
    %272 = arith.addf %82, %208 : vector<1x256xf32>
    %273 = arith.addf %89, %215 : vector<1x256xf32>
    %274 = arith.addf %96, %222 : vector<1x256xf32>
    %275 = arith.addf %114, %240 : vector<1x256xf32>
    %276 = arith.addf %139, %265 : vector<1x256xf32>
    %277 = arith.addf %143, %269 : vector<1x256xf32>
    %cst_61 = arith.constant 1.000000e+00 : f32
    %278 = vector.broadcast %cst_61 : f32 to vector<1x256xf32>
    %279 = arith.mulf %270, %278 : vector<1x256xf32>
    %cst_62 = arith.constant 1.000000e+00 : f32
    %280 = vector.broadcast %cst_62 : f32 to vector<1x256xf32>
    %281 = arith.mulf %271, %280 : vector<1x256xf32>
    %282 = arith.addf %279, %281 : vector<1x256xf32>
    %cst_63 = arith.constant 5.000000e-01 : f32
    %283 = vector.broadcast %cst_63 : f32 to vector<1x256xf32>
    %284 = arith.mulf %272, %283 : vector<1x256xf32>
    %285 = arith.addf %282, %284 : vector<1x256xf32>
    %cst_64 = arith.constant 5.000000e-01 : f32
    %286 = vector.broadcast %cst_64 : f32 to vector<1x256xf32>
    %287 = arith.mulf %273, %286 : vector<1x256xf32>
    %288 = arith.addf %285, %287 : vector<1x256xf32>
    %cst_65 = arith.constant 1.000000e+00 : f32
    %289 = vector.broadcast %cst_65 : f32 to vector<1x256xf32>
    %290 = arith.mulf %274, %289 : vector<1x256xf32>
    %291 = arith.addf %288, %290 : vector<1x256xf32>
    %cst_66 = arith.constant 1.000000e+00 : f32
    %292 = vector.broadcast %cst_66 : f32 to vector<1x256xf32>
    %293 = arith.mulf %275, %292 : vector<1x256xf32>
    %294 = arith.addf %291, %293 : vector<1x256xf32>
    %cst_67 = arith.constant 2.000000e-01 : f32
    %295 = vector.broadcast %cst_67 : f32 to vector<1x256xf32>
    %296 = arith.mulf %276, %295 : vector<1x256xf32>
    %297 = arith.addf %294, %296 : vector<1x256xf32>
    %cst_68 = arith.constant 1.000000e-01 : f32
    %298 = vector.broadcast %cst_68 : f32 to vector<1x256xf32>
    %299 = arith.mulf %277, %298 : vector<1x256xf32>
    %300 = arith.addf %297, %299 : vector<1x256xf32>
    %c0_69 = arith.constant 0 : index
    %c0_70 = arith.constant 0 : index
    %301 = vector.load %arg4[%c0_69, %c0_70] : memref<9x256xf32, #tpu.memory_space<vmem>>, vector<1x256xf32>
    tpu.vector_store %arg4[%c0_69, %c0_70], %270 {strides = array<i32>} : memref<9x256xf32, #tpu.memory_space<vmem>>, vector<1x256xf32>,
    %c1_71 = arith.constant 1 : index
    %c0_72 = arith.constant 0 : index
    %302 = vector.load %arg4[%c1_71, %c0_72] : memref<9x256xf32, #tpu.memory_space<vmem>>, vector<1x256xf32>
    tpu.vector_store %arg4[%c1_71, %c0_72], %271 {strides = array<i32>} : memref<9x256xf32, #tpu.memory_space<vmem>>, vector<1x256xf32>,
    %c2 = arith.constant 2 : index
    %c0_73 = arith.constant 0 : index
    %303 = vector.load %arg4[%c2, %c0_73] : memref<9x256xf32, #tpu.memory_space<vmem>>, vector<1x256xf32>
    tpu.vector_store %arg4[%c2, %c0_73], %272 {strides = array<i32>} : memref<9x256xf32, #tpu.memory_space<vmem>>, vector<1x256xf32>,
    %c3 = arith.constant 3 : index
    %c0_74 = arith.constant 0 : index
    %304 = vector.load %arg4[%c3, %c0_74] : memref<9x256xf32, #tpu.memory_space<vmem>>, vector<1x256xf32>
    tpu.vector_store %arg4[%c3, %c0_74], %273 {strides = array<i32>} : memref<9x256xf32, #tpu.memory_space<vmem>>, vector<1x256xf32>,
    %c4 = arith.constant 4 : index
    %c0_75 = arith.constant 0 : index
    %305 = vector.load %arg4[%c4, %c0_75] : memref<9x256xf32, #tpu.memory_space<vmem>>, vector<1x256xf32>
    tpu.vector_store %arg4[%c4, %c0_75], %274 {strides = array<i32>} : memref<9x256xf32, #tpu.memory_space<vmem>>, vector<1x256xf32>,
    %c5 = arith.constant 5 : index
    %c0_76 = arith.constant 0 : index
    %306 = vector.load %arg4[%c5, %c0_76] : memref<9x256xf32, #tpu.memory_space<vmem>>, vector<1x256xf32>
    tpu.vector_store %arg4[%c5, %c0_76], %275 {strides = array<i32>} : memref<9x256xf32, #tpu.memory_space<vmem>>, vector<1x256xf32>,
    %c6 = arith.constant 6 : index
    %c0_77 = arith.constant 0 : index
    %307 = vector.load %arg4[%c6, %c0_77] : memref<9x256xf32, #tpu.memory_space<vmem>>, vector<1x256xf32>
    tpu.vector_store %arg4[%c6, %c0_77], %276 {strides = array<i32>} : memref<9x256xf32, #tpu.memory_space<vmem>>, vector<1x256xf32>,
    %c7 = arith.constant 7 : index
    %c0_78 = arith.constant 0 : index
    %308 = vector.load %arg4[%c7, %c0_78] : memref<9x256xf32, #tpu.memory_space<vmem>>, vector<1x256xf32>
    tpu.vector_store %arg4[%c7, %c0_78], %277 {strides = array<i32>} : memref<9x256xf32, #tpu.memory_space<vmem>>, vector<1x256xf32>,
    %c8 = arith.constant 8 : index
    %c0_79 = arith.constant 0 : index
    %309 = vector.load %arg4[%c8, %c0_79] : memref<9x256xf32, #tpu.memory_space<vmem>>, vector<1x256xf32>
    tpu.vector_store %arg4[%c8, %c0_79], %300 {strides = array<i32>} : memref<9x256xf32, #tpu.memory_space<vmem>>, vector<1x256xf32>,
    %c0_80 = arith.constant 0 : index
    %c0_81 = arith.constant 0 : index
    %310 = vector.load %arg4[%c0_80, %c0_81] : memref<9x256xf32, #tpu.memory_space<vmem>>, vector<9x256xf32>
    %cst_82 = arith.constant dense<0.000000e+00> : vector<9xf32>
    %311 = vector.multi_reduction <add>, %310, %cst_82 [1] : vector<9x256xf32> to vector<9xf32>
    %312 = vector.shape_cast %311 : vector<9xf32> to vector<9x1xf32>
    %313 = vector.shape_cast %312 : vector<9x1xf32> to vector<9x1xf32>
    %314 = vector.broadcast %313 : vector<9x1xf32> to vector<9x128xf32>
    %c0_83 = arith.constant 0 : index
    %c0_84 = arith.constant 0 : index
    %315 = vector.load %arg3[%c0_83, %c0_84] : memref<9x128xf32, #tpu.memory_space<vmem>>, vector<9x128xf32>
    tpu.vector_store %arg3[%c0_83, %c0_84], %314 {strides = array<i32>} : memref<9x128xf32, #tpu.memory_space<vmem>>, vector<9x128xf32>,
    return
  }
}

</mosaic_0001>

<llo_original>
// kernel: tpu_custom_call.1
$region0: #{tpu_custom_call.1}
  #allocation0 [shape = 'u32[]', space=smem, size = 0x4, offset = 0x4, fixed_abs, tag = 'smem constant byte address 0x4 - core index']
  #allocation1 [shape = 'u32[144,128]{1,0:T(1,128)}', space=vmem, size = 0x12000, scoped, tag = 'internal scratch']
  #allocation2 [shape = 'f32[9,256]{1,0:T(8,128)}', space=vmem, size = 0x4000, scoped, tag = 'scratch operand']
  %s0 = inlined_call_operand.vmem [shape: f32[2,6,256], index: 0, kind: input, shape index: {}]
  %s1 = inlined_call_operand.vmem [shape: f32[2,6,256], index: 1, kind: input, shape index: {}]
  %s2 = inlined_call_operand.vmem [shape: f32[2,6,256], index: 2, kind: input, shape index: {}]
  %s3 = inlined_call_operand.hbm [shape: f32[9,128], index: 3, kind: output, shape index: {}]
  %s4 = sld [smem:[#allocation0]]
  $region22: #{tpu_custom_call.1} parent=0
    _
  %s6 = ssub.s32 1, %s4
  %s7 = scalar_select 0, %s6, %s4
  $region1: #{tpu_custom_call.1} parent=0
    #allocation3 [shape = 'u8[8192]{0}', space=vmem, size = 0x2000, scoped, tag = 'output window, operand 0, single buffered']
    #allocation4 [shape = 's32[1]{0}', space=sflag, size = 0x4, scoped, tag = 'scoped memory for tpu_custom_call.1']
    %8 = vsyncpa [#allocation4], 0
    // Predicated region
    $region2: #{tpu_custom_call.1} parent=1 // pred_check
      _
    $region3: #{tpu_custom_call.1} parent=1 // pred_check_branch
      %10 = sbr.rel (0) target = $region5
    $region4: #{tpu_custom_call.1} parent=1 // pred_region
      _
    $region5: #{tpu_custom_call.1} parent=1 // pred_fallthru
      _
    // Predicated region
    $region6: #{tpu_custom_call.1} parent=1 // pred_check
      _
    $region7: #{tpu_custom_call.1} parent=1 // pred_check_branch
      %12 = sbr.rel (0) target = $region9
    $region8: #{tpu_custom_call.1} parent=1 // pred_region
      _
    $region9: #{tpu_custom_call.1} parent=1 // pred_fallthru
      _
    // Predicated region
    $region10: #{tpu_custom_call.1} parent=1 // pred_check
      _
    $region11: #{tpu_custom_call.1} parent=1 // pred_check_branch
      %14 = sbr.rel (0) target = $region13
    $region12: #{tpu_custom_call.1} parent=1 // pred_region
      _
    $region13: #{tpu_custom_call.1} parent=1 // pred_fallthru
      _
    %v15 = vlaneseq
    %v16 = vand.u32 %v15, 127
    %v17 = vadd.s32 %v16, 128
    %v18 = vshra.s32 %v16, 4
    %v19 = vshra.s32 %v17, 4
    %v20 = vand.u32 %v16, 15
    %v21 = vand.u32 %v17, 15
    %vm22 = vcmp.ge.s32.totalorder %v18, 2
    %vm23 = vcmp.ge.s32.totalorder %v19, 2
    %vm24 = vcmp.lt.s32.totalorder %v18, 14
    %vm25 = vcmp.lt.s32.totalorder %v19, 14
    %vm26 = vmand %vm22, %vm24
    %vm27 = vmand %vm23, %vm25
    %vm28 = vcmp.ge.s32.totalorder %v20, 2
    %vm29 = vcmp.ge.s32.totalorder %v21, 2
    %vm30 = vmand %vm26, %vm28
    %vm31 = vmand %vm27, %vm29
    %vm32 = vcmp.lt.s32.totalorder %v20, 14
    %vm33 = vcmp.lt.s32.totalorder %v21, 14
    %vm34 = vmand %vm30, %vm32
    %vm35 = vmand %vm31, %vm33
    %v36 = vsel %vm34, 1, 0
    %v37 = vsel %vm35, 1, 0
    %v38 = vcvt.s32.f32 %v36
    %v39 = vcvt.s32.f32 %v37
    %v40 = vld [vmem:[%s0] sm:$0x3f]
    %v41 = vld [vmem:[%s0 + $0x8] sm:$0x3f]
    %v42 = vld [vmem:[%s1] sm:$0x3f]
    %v43 = vld [vmem:[%s1 + $0x8] sm:$0x3f]
    %v44 = vld [vmem:[%s2] sm:$0x3f]
    %v45 = vld [vmem:[%s2 + $0x8] sm:$0x3f]
    %v46 = vmul.f32 %v40, %v38
    %v47 = vmul.f32 %v41, %v39
    %v48 = vmul.f32 %v42, %v38
    %v49 = vmul.f32 %v43, %v39
    %v50 = vmul.f32 %v46, 0.5
    %v51 = vmul.f32 %v47, 0.5
    %v52 = vadd.f32 %v50, 0.5
    %v53 = vadd.f32 %v51, 0.5
    %v54 = vmax.f32 %v52, 0.0
    %v55 = vmax.f32 %v53, 0.0
    %v56 = vmin.f32 %v54, 1.0
    %v57 = vmin.f32 %v55, 1.0
    %v58 = vmul.f32 %v56, %v38
    %v59 = vmul.f32 %v57, %v39
    %v60 = vmul.f32 %v40, %v40
    %v61 = vmul.f32 %v41, %v41
    %v64 = vrot.slane %v60, 1
    %v65 = vrot.slane %v61, 1
    %v68 = vadd.f32 %v60, %v64
    %v69 = vadd.f32 %v61, %v65
    %v70 = vrot.slane %v60, 2
    %v71 = vrot.slane %v61, 2
    %v74 = vadd.f32 %v68, %v70
    %v75 = vadd.f32 %v69, %v71
    %v76 = vmax.f32 %v74, 1e-24
    %v77 = vmax.f32 %v75, 1e-24
    %v78 = vrsqrt.pop %v76
    %v79 = vrsqrt.pop %v77
    %v80 = vlaneseq
    %v81 = vshrl.u32 %v80, 7
    %v82 = vsub.s32 1, %v81
    %v83 = vrot.slane %v78, %v82
    %v84 = vlaneseq
    %v85 = vshrl.u32 %v84, 7
    %v86 = vsub.s32 1, %v85
    %v87 = vrot.slane %v79, %v86
    %v88 = vmul.f32 %v40, %v83
    %v89 = vmul.f32 %v41, %v87
    %v90 = vmul.f32 %v42, %v42
    %v91 = vmul.f32 %v43, %v43
    %v94 = vrot.slane %v90, 1
    %v95 = vrot.slane %v91, 1
    %v98 = vadd.f32 %v90, %v94
    %v99 = vadd.f32 %v91, %v95
    %v100 = vrot.slane %v90, 2
    %v101 = vrot.slane %v91, 2
    %v104 = vadd.f32 %v98, %v100
    %v105 = vadd.f32 %v99, %v101
    %v106 = vmax.f32 %v104, 1e-24
    %v107 = vmax.f32 %v105, 1e-24
    %v108 = vrsqrt.pop %v106
    %v109 = vrsqrt.pop %v107
    %v110 = vlaneseq
    %v111 = vshrl.u32 %v110, 7
    %v112 = vsub.s32 1, %v111
    %v113 = vrot.slane %v108, %v112
    %v114 = vlaneseq
    %v115 = vshrl.u32 %v114, 7
    %v116 = vsub.s32 1, %v115
    %v117 = vrot.slane %v109, %v116
    %v118 = vmul.f32 %v42, %v113
    %v119 = vmul.f32 %v43, %v117
    %v120 = vsub.f32 %v46, %v48
    %v121 = vsub.f32 %v47, %v49
    %v122 = vand.u32 2147483647, %v120
    %v123 = vand.u32 2147483647, %v121
    %v124 = vmul.f32 %v122, 0.001953125
    %v125 = vmul.f32 %v123, 0.001953125
    %v126 = vsub.f32 %v88, %v118
    %v127 = vsub.f32 %v89, %v119
    %v128 = vlaneseq
    %v129 = vshrl.u32 %v128, 7
    %v130 = vsub.s32 0, %v129
    %v131 = vrot.slane %v58, %v130
    %v132 = vlaneseq
    %v133 = vshrl.u32 %v132, 7
    %v134 = vsub.s32 0, %v133
    %v135 = vrot.slane %v59, %v134
    %v136 = vmul.f32 %v126, %v131
    %v137 = vmul.f32 %v127, %v135
    %v138 = vmul.f32 %v136, %v136
    %v139 = vmul.f32 %v137, %v137
    %v142 = vrot.slane %v138, 1
    %v143 = vrot.slane %v139, 1
    %v146 = vadd.f32 %v138, %v142
    %v147 = vadd.f32 %v139, %v143
    %v148 = vrot.slane %v138, 2
    %v149 = vrot.slane %v139, 2
    %v152 = vadd.f32 %v146, %v148
    %v153 = vadd.f32 %v147, %v149
    %v154 = vmul.f32 %v152, 0.0006510417
    %v155 = vmul.f32 %v153, 0.0006510417
    %v156 = vsub.f32 %v40, %v42
    %v157 = vsub.f32 %v41, %v43
    %v158 = vand.u32 2147483647, %v156
    %v159 = vand.u32 2147483647, %v157
    %v162 = vrot.slane %v58, 3
    %v163 = vrot.slane %v59, 3
    %v166 = vmul.f32 %v158, %v162
    %v167 = vmul.f32 %v159, %v163
    %v168 = vmul.f32 %v166, 0.001953125
    %v169 = vmul.f32 %v167, 0.001953125
    %v170 = vrot.slane %v58, 4
    %v171 = vrot.slane %v59, 4
    %v174 = vmul.f32 %v156, %v170
    %v175 = vmul.f32 %v157, %v171
    %v176 = vmul.f32 %v174, %v174
    %v177 = vmul.f32 %v175, %v175
    %v178 = vmul.f32 %v176, 0.001953125
    %v179 = vmul.f32 %v177, 0.001953125
    %v180 = vmul.f32 %v48, %v48
    %v181 = vmul.f32 %v49, %v49
    %v182 = vsub.f32 %v180, 2.0
    %v183 = vsub.f32 %v181, 2.0
    %v184 = vmax.f32 %v182, 0.0
    %v185 = vmax.f32 %v183, 0.0
    %v186 = vmul.f32 %v184, 0.001953125
    %v187 = vmul.f32 %v185, 0.001953125
    %v188 = vmul.f32 %v48, 0.5
    %v189 = vmul.f32 %v49, 0.5
    %v190 = vadd.f32 %v188, 0.5
    %v191 = vadd.f32 %v189, 0.5
    %v192 = vmax.f32 %v190, 0.0
    %v193 = vmax.f32 %v191, 0.0
    %v194 = vmul.f32 %v190, %v52
    %v195 = vmul.f32 %v191, %v53
    %v196 = vsub.f32 %v192, %v194
    %v197 = vsub.f32 %v193, %v195
    %v198 = vand.u32 2147483647, %v190
    %v199 = vand.u32 2147483647, %v191
    %v200 = vsub.f32 0.0, %v198
    %v201 = vsub.f32 0.0, %v199
    %v202 = vmul.f32 %v200, 1.442695
    %v203 = vpow.pop %v202
    %v204 = vmul.f32 %v201, 1.442695
    %v205 = vpow.pop %v204
    %v206 = vadd.f32 %v203, 1.0
    %v207 = vadd.f32 %v205, 1.0
    %v208 = vlog2.pop %v206
    %v209 = vmul.f32 %v208, 0.6931472
    %v210 = vlog2.pop %v207
    %v211 = vmul.f32 %v210, 0.6931472
    %v212 = vadd.f32 %v196, %v209
    %v213 = vadd.f32 %v197, %v211
    %v214 = vmul.f32 %v212, 0.001953125
    %v215 = vmul.f32 %v213, 0.001953125
    %v216 = vmul.f32 %v44, %v38
    %v217 = vmul.f32 %v45, %v39
    %v218 = vmul.f32 %v44, %v44
    %v219 = vmul.f32 %v45, %v45
    %v222 = vrot.slane %v218, 1
    %v223 = vrot.slane %v219, 1
    %v226 = vadd.f32 %v218, %v222
    %v227 = vadd.f32 %v219, %v223
    %v228 = vrot.slane %v218, 2
    %v229 = vrot.slane %v219, 2
    %v232 = vadd.f32 %v226, %v228
    %v233 = vadd.f32 %v227, %v229
    %v234 = vmax.f32 %v232, 1e-24
    %v235 = vmax.f32 %v233, 1e-24
    %v236 = vrsqrt.pop %v234
    %v237 = vrsqrt.pop %v235
    %v238 = vlaneseq
    %v239 = vshrl.u32 %v238, 7
    %v240 = vsub.s32 1, %v239
    %v241 = vrot.slane %v236, %v240
    %v242 = vlaneseq
    %v243 = vshrl.u32 %v242, 7
    %v244 = vsub.s32 1, %v243
    %v245 = vrot.slane %v237, %v244
    %v246 = vmul.f32 %v44, %v241
    %v247 = vmul.f32 %v45, %v245
    %v248 = vsub.f32 %v118, %v246
    %v249 = vsub.f32 %v119, %v247
    %v250 = vmul.f32 %v248, %v131
    %v251 = vmul.f32 %v249, %v135
    %v252 = vmul.f32 %v250, %v250
    %v253 = vmul.f32 %v251, %v251
    %v256 = vrot.slane %v252, 1
    %v257 = vrot.slane %v253, 1
    %v260 = vadd.f32 %v252, %v256
    %v261 = vadd.f32 %v253, %v257
    %v262 = vrot.slane %v252, 2
    %v263 = vrot.slane %v253, 2
    %v266 = vadd.f32 %v260, %v262
    %v267 = vadd.f32 %v261, %v263
    %v268 = vmul.f32 %v266, 0.0006510417
    %v269 = vmul.f32 %v267, 0.0006510417
    %v270 = vsub.f32 %v48, %v216
    %v271 = vsub.f32 %v49, %v217
    %v272 = vand.u32 2147483647, %v270
    %v273 = vand.u32 2147483647, %v271
    %v274 = vmul.f32 %v272, 0.001953125
    %v275 = vmul.f32 %v273, 0.001953125
    %s276 = scalar_lea.vmem %s0, 16
    %v277 = vld [vmem:[%s276] sm:$0x3f]
    %v278 = vld [vmem:[%s276 + $0x8] sm:$0x3f]
    %s279 = scalar_lea.vmem %s1, 16
    %v280 = vld [vmem:[%s279] sm:$0x3f]
    %v281 = vld [vmem:[%s279 + $0x8] sm:$0x3f]
    %s282 = scalar_lea.vmem %s2, 16
    %v283 = vld [vmem:[%s282] sm:$0x3f]
    %v284 = vld [vmem:[%s282 + $0x8] sm:$0x3f]
    %v285 = vmul.f32 %v277, %v38
    %v286 = vmul.f32 %v278, %v39
    %v287 = vmul.f32 %v280, %v38
    %v288 = vmul.f32 %v281, %v39
    %v289 = vmul.f32 %v285, 0.5
    %v290 = vmul.f32 %v286, 0.5
    %v291 = vadd.f32 %v289, 0.5
    %v292 = vadd.f32 %v290, 0.5
    %v293 = vmax.f32 %v291, 0.0
    %v294 = vmax.f32 %v292, 0.0
    %v295 = vmin.f32 %v293, 1.0
    %v296 = vmin.f32 %v294, 1.0
    %v297 = vmul.f32 %v295, %v38
    %v298 = vmul.f32 %v296, %v39
    %v299 = vmul.f32 %v277, %v277
    %v300 = vmul.f32 %v278, %v278
    %v303 = vrot.slane %v299, 1
    %v304 = vrot.slane %v300, 1
    %v307 = vadd.f32 %v299, %v303
    %v308 = vadd.f32 %v300, %v304
    %v309 = vrot.slane %v299, 2
    %v310 = vrot.slane %v300, 2
    %v313 = vadd.f32 %v307, %v309
    %v314 = vadd.f32 %v308, %v310
    %v315 = vmax.f32 %v313, 1e-24
    %v316 = vmax.f32 %v314, 1e-24
    %v317 = vrsqrt.pop %v315
    %v318 = vrsqrt.pop %v316
    %v319 = vlaneseq
    %v320 = vshrl.u32 %v319, 7
    %v321 = vsub.s32 1, %v320
    %v322 = vrot.slane %v317, %v321
    %v323 = vlaneseq
    %v324 = vshrl.u32 %v323, 7
    %v325 = vsub.s32 1, %v324
    %v326 = vrot.slane %v318, %v325
    %v327 = vmul.f32 %v277, %v322
    %v328 = vmul.f32 %v278, %v326
    %v329 = vmul.f32 %v280, %v280
    %v330 = vmul.f32 %v281, %v281
    %v333 = vrot.slane %v329, 1
    %v334 = vrot.slane %v330, 1
    %v337 = vadd.f32 %v329, %v333
    %v338 = vadd.f32 %v330, %v334
    %v339 = vrot.slane %v329, 2
    %v340 = vrot.slane %v330, 2
    %v343 = vadd.f32 %v337, %v339
    %v344 = vadd.f32 %v338, %v340
    %v345 = vmax.f32 %v343, 1e-24
    %v346 = vmax.f32 %v344, 1e-24
    %v347 = vrsqrt.pop %v345
    %v348 = vrsqrt.pop %v346
    %v349 = vlaneseq
    %v350 = vshrl.u32 %v349, 7
    %v351 = vsub.s32 1, %v350
    %v352 = vrot.slane %v347, %v351
    %v353 = vlaneseq
    %v354 = vshrl.u32 %v353, 7
    %v355 = vsub.s32 1, %v354
    %v356 = vrot.slane %v348, %v355
    %v357 = vmul.f32 %v280, %v352
    %v358 = vmul.f32 %v281, %v356
    %v359 = vsub.f32 %v285, %v287
    %v360 = vsub.f32 %v286, %v288
    %v361 = vand.u32 2147483647, %v359
    %v362 = vand.u32 2147483647, %v360
    %v363 = vmul.f32 %v361, 0.001953125
    %v364 = vmul.f32 %v362, 0.001953125
    %v365 = vsub.f32 %v327, %v357
    %v366 = vsub.f32 %v328, %v358
    %v367 = vlaneseq
    %v368 = vshrl.u32 %v367, 7
    %v369 = vsub.s32 0, %v368
    %v370 = vrot.slane %v297, %v369
    %v371 = vlaneseq
    %v372 = vshrl.u32 %v371, 7
    %v373 = vsub.s32 0, %v372
    %v374 = vrot.slane %v298, %v373
    %v375 = vmul.f32 %v365, %v370
    %v376 = vmul.f32 %v366, %v374
    %v377 = vmul.f32 %v375, %v375
    %v378 = vmul.f32 %v376, %v376
    %v381 = vrot.slane %v377, 1
    %v382 = vrot.slane %v378, 1
    %v385 = vadd.f32 %v377, %v381
    %v386 = vadd.f32 %v378, %v382
    %v387 = vrot.slane %v377, 2
    %v388 = vrot.slane %v378, 2
    %v391 = vadd.f32 %v385, %v387
    %v392 = vadd.f32 %v386, %v388
    %v393 = vmul.f32 %v391, 0.0006510417
    %v394 = vmul.f32 %v392, 0.0006510417
    %v395 = vsub.f32 %v277, %v280
    %v396 = vsub.f32 %v278, %v281
    %v397 = vand.u32 2147483647, %v395
    %v398 = vand.u32 2147483647, %v396
    %v401 = vrot.slane %v297, 3
    %v402 = vrot.slane %v298, 3
    %v405 = vmul.f32 %v397, %v401
    %v406 = vmul.f32 %v398, %v402
    %v407 = vmul.f32 %v405, 0.001953125
    %v408 = vmul.f32 %v406, 0.001953125
    %v409 = vrot.slane %v297, 4
    %v410 = vrot.slane %v298, 4
    %v413 = vmul.f32 %v395, %v409
    %v414 = vmul.f32 %v396, %v410
    %v415 = vmul.f32 %v413, %v413
    %v416 = vmul.f32 %v414, %v414
    %v417 = vmul.f32 %v415, 0.001953125
    %v418 = vmul.f32 %v416, 0.001953125
    %v419 = vmul.f32 %v287, %v287
    %v420 = vmul.f32 %v288, %v288
    %v421 = vsub.f32 %v419, 2.0
    %v422 = vsub.f32 %v420, 2.0
    %v423 = vmax.f32 %v421, 0.0
    %v424 = vmax.f32 %v422, 0.0
    %v425 = vmul.f32 %v423, 0.001953125
    %v426 = vmul.f32 %v424, 0.001953125
    %v427 = vmul.f32 %v287, 0.5
    %v428 = vmul.f32 %v288, 0.5
    %v429 = vadd.f32 %v427, 0.5
    %v430 = vadd.f32 %v428, 0.5
    %v431 = vmax.f32 %v429, 0.0
    %v432 = vmax.f32 %v430, 0.0
    %v433 = vmul.f32 %v429, %v291
    %v434 = vmul.f32 %v430, %v292
    %v435 = vsub.f32 %v431, %v433
    %v436 = vsub.f32 %v432, %v434
    %v437 = vand.u32 2147483647, %v429
    %v438 = vand.u32 2147483647, %v430
    %v439 = vsub.f32 0.0, %v437
    %v440 = vsub.f32 0.0, %v438
    %v441 = vmul.f32 %v439, 1.442695
    %v442 = vpow.pop %v441
    %v443 = vmul.f32 %v440, 1.442695
    %v444 = vpow.pop %v443
    %v445 = vadd.f32 %v442, 1.0
    %v446 = vadd.f32 %v444, 1.0
    %v447 = vlog2.pop %v445
    %v448 = vmul.f32 %v447, 0.6931472
    %v449 = vlog2.pop %v446
    %v450 = vmul.f32 %v449, 0.6931472
    %v451 = vadd.f32 %v435, %v448
    %v452 = vadd.f32 %v436, %v450
    %v453 = vmul.f32 %v451, 0.001953125
    %v454 = vmul.f32 %v452, 0.001953125
    %v455 = vmul.f32 %v283, %v38
    %v456 = vmul.f32 %v284, %v39
    %v457 = vmul.f32 %v283, %v283
    %v458 = vmul.f32 %v284, %v284
    %v461 = vrot.slane %v457, 1
    %v462 = vrot.slane %v458, 1
    %v465 = vadd.f32 %v457, %v461
    %v466 = vadd.f32 %v458, %v462
    %v467 = vrot.slane %v457, 2
    %v468 = vrot.slane %v458, 2
    %v471 = vadd.f32 %v465, %v467
    %v472 = vadd.f32 %v466, %v468
    %v473 = vmax.f32 %v471, 1e-24
    %v474 = vmax.f32 %v472, 1e-24
    %v475 = vrsqrt.pop %v473
    %v476 = vrsqrt.pop %v474
    %v477 = vlaneseq
    %v478 = vshrl.u32 %v477, 7
    %v479 = vsub.s32 1, %v478
    %v480 = vrot.slane %v475, %v479
    %v481 = vlaneseq
    %v482 = vshrl.u32 %v481, 7
    %v483 = vsub.s32 1, %v482
    %v484 = vrot.slane %v476, %v483
    %v485 = vmul.f32 %v283, %v480
    %v486 = vmul.f32 %v284, %v484
    %v487 = vsub.f32 %v357, %v485
    %v488 = vsub.f32 %v358, %v486
    %v489 = vmul.f32 %v487, %v370
    %v490 = vmul.f32 %v488, %v374
    %v491 = vmul.f32 %v489, %v489
    %v492 = vmul.f32 %v490, %v490
    %v495 = vrot.slane %v491, 1
    %v496 = vrot.slane %v492, 1
    %v499 = vadd.f32 %v491, %v495
    %v500 = vadd.f32 %v492, %v496
    %v501 = vrot.slane %v491, 2
    %v502 = vrot.slane %v492, 2
    %v505 = vadd.f32 %v499, %v501
    %v506 = vadd.f32 %v500, %v502
    %v507 = vmul.f32 %v505, 0.0006510417
    %v508 = vmul.f32 %v506, 0.0006510417
    %v509 = vsub.f32 %v287, %v455
    %v510 = vsub.f32 %v288, %v456
    %v511 = vand.u32 2147483647, %v509
    %v512 = vand.u32 2147483647, %v510
    %v513 = vmul.f32 %v511, 0.001953125
    %v514 = vmul.f32 %v512, 0.001953125
    %v515 = vadd.f32 %v124, %v363
    %v516 = vadd.f32 %v125, %v364
    %v517 = vadd.f32 %v154, %v393
    %v518 = vadd.f32 %v155, %v394
    %v519 = vadd.f32 %v168, %v407
    %v520 = vadd.f32 %v169, %v408
    %v521 = vadd.f32 %v178, %v417
    %v522 = vadd.f32 %v179, %v418
    %v523 = vadd.f32 %v186, %v425
    %v524 = vadd.f32 %v187, %v426
    %v525 = vadd.f32 %v214, %v453
    %v526 = vadd.f32 %v215, %v454
    %v527 = vadd.f32 %v268, %v507
    %v528 = vadd.f32 %v269, %v508
    %v529 = vadd.f32 %v274, %v513
    %v530 = vadd.f32 %v275, %v514
    %v533 = vrot.slane %v517, 1
    %v534 = vrot.slane %v518, 1
    %v537 = vadd.f32 %v515, %v533
    %v538 = vadd.f32 %v516, %v534
    %v539 = vmul.f32 %v519, 0.5
    %v540 = vmul.f32 %v520, 0.5
    %v543 = vrot.slane %v539, 5
    %v544 = vrot.slane %v540, 5
    %v547 = vadd.f32 %v537, %v543
    %v548 = vadd.f32 %v538, %v544
    %v549 = vmul.f32 %v521, 0.5
    %v550 = vmul.f32 %v522, 0.5
    %v553 = vrot.slane %v549, 4
    %v554 = vrot.slane %v550, 4
    %v557 = vadd.f32 %v547, %v553
    %v558 = vadd.f32 %v548, %v554
    %v559 = vadd.f32 %v557, %v523
    %v560 = vadd.f32 %v558, %v524
    %v561 = vadd.f32 %v559, %v525
    %v562 = vadd.f32 %v560, %v526
    %v563 = vmul.f32 %v527, 0.2
    %v564 = vmul.f32 %v528, 0.2
    %v567 = vrot.slane %v563, 1
    %v568 = vrot.slane %v564, 1
    %v571 = vadd.f32 %v561, %v567
    %v572 = vadd.f32 %v562, %v568
    %v573 = vmul.f32 %v529, 0.1
    %v574 = vmul.f32 %v530, 0.1
    %v575 = vadd.f32 %v571, %v573
    %v576 = vadd.f32 %v572, %v574
    %v579 = vcombine.low %v515, %v516
    %v581 = vunpack.c.l.s4 1966171168
    %v582 = vunpack.c.0.s8 %v581
    %v583 = vlaneseq
    %v584 = vshrl.u32 %v583, 7
    %v585 = vsub.s32 %v582, %v584
    %v586 = vrot.slane %v579, %v585
    %v588 = vunpack.c.l.s4 1966171168
    %v589 = vunpack.c.0.s8 %v588
    %v590 = vlaneseq
    %v591 = vshrl.u32 %v590, 7
    %v592 = vsub.s32 %v589, %v591
    %v593 = vrot.slane %v586, %v592
    %v595 = vlaneseq
    %vm596 = vcmp.ge.s32.totalorder %v595, 0
    %vm597 = vcmp.lt.s32.totalorder %v595, 256
    %vm598 = vmand %vm596, %vm597
    %599 = vst.msk [vmem:[#allocation2] ss:$8 sm:$0x3] %vm598, %v593
    %600 = vst.msk [vmem:[#allocation2] ss:$8 sm:$0x0] %vm598, %v593
    %v601 = vcombine.low %v517, %v518
    %v603 = vunpack.c.l.s4 1966171168
    %v604 = vunpack.c.0.s8 %v603
    %v605 = vlaneseq
    %v606 = vshrl.u32 %v605, 7
    %v607 = vsub.s32 %v604, %v606
    %v608 = vrot.slane %v601, %v607
    %v609 = vcombine.high %v608, %v608
    %v611 = vunpack.c.l.s4 1966171168
    %v612 = vunpack.c.0.s8 %v611
    %v613 = vlaneseq
    %v614 = vshrl.u32 %v613, 7
    %v615 = vsub.s32 %v612, %v614
    %v616 = vrot.slane %v609, %v615
    %s618 = scalar_lea.vmem [#allocation2], 1
    %619 = vst.msk [vmem:[%s618] ss:$8 sm:$0x3] %vm598, %v616
    %620 = vst.msk [vmem:[%s618] ss:$8 sm:$0x0] %vm598, %v616
    %v623 = vcombine.high %v519, %v520
    %v625 = vunpack.c.l.s4 1966171168
    %v626 = vunpack.c.0.s8 %v625
    %v627 = vlaneseq
    %v628 = vshrl.u32 %v627, 7
    %v629 = vsub.s32 %v626, %v628
    %v630 = vrot.slane %v623, %v629
    %v631 = vcombine.high %v630, %v630
    %v633 = vunpack.c.l.s4 1966171168
    %v634 = vunpack.c.0.s8 %v633
    %v635 = vlaneseq
    %v636 = vshrl.u32 %v635, 7
    %v637 = vsub.s32 %v634, %v636
    %v638 = vrot.slane %v631, %v637
    %s640 = scalar_lea.vmem [#allocation2], 2
    %641 = vst.msk [vmem:[%s640] ss:$8 sm:$0x3] %vm598, %v638
    %642 = vst.msk [vmem:[%s640] ss:$8 sm:$0x0] %vm598, %v638
    %v645 = vcombine.high %v521, %v522
    %v647 = vunpack.c.l.s4 1966171168
    %v648 = vunpack.c.0.s8 %v647
    %v649 = vlaneseq
    %v650 = vshrl.u32 %v649, 7
    %v651 = vsub.s32 %v648, %v650
    %v652 = vrot.slane %v645, %v651
    %v654 = vunpack.c.l.s4 1966171168
    %v655 = vunpack.c.0.s8 %v654
    %v656 = vlaneseq
    %v657 = vshrl.u32 %v656, 7
    %v658 = vsub.s32 %v655, %v657
    %v659 = vrot.slane %v652, %v658
    %s661 = scalar_lea.vmem [#allocation2], 3
    %662 = vst.msk [vmem:[%s661] ss:$8 sm:$0x3] %vm598, %v659
    %663 = vst.msk [vmem:[%s661] ss:$8 sm:$0x0] %vm598, %v659
    %v666 = vcombine.low %v523, %v524
    %v668 = vunpack.c.l.s4 1966171168
    %v669 = vunpack.c.0.s8 %v668
    %v670 = vlaneseq
    %v671 = vshrl.u32 %v670, 7
    %v672 = vsub.s32 %v669, %v671
    %v673 = vrot.slane %v666, %v672
    %v675 = vunpack.c.l.s4 1966171168
    %v676 = vunpack.c.0.s8 %v675
    %v677 = vlaneseq
    %v678 = vshrl.u32 %v677, 7
    %v679 = vsub.s32 %v676, %v678
    %v680 = vrot.slane %v673, %v679
    %s682 = scalar_lea.vmem [#allocation2], 4
    %683 = vst.msk [vmem:[%s682] ss:$8 sm:$0x3] %vm598, %v680
    %684 = vst.msk [vmem:[%s682] ss:$8 sm:$0x0] %vm598, %v680
    %v687 = vcombine.low %v525, %v526
    %v689 = vunpack.c.l.s4 1966171168
    %v690 = vunpack.c.0.s8 %v689
    %v691 = vlaneseq
    %v692 = vshrl.u32 %v691, 7
    %v693 = vsub.s32 %v690, %v692
    %v694 = vrot.slane %v687, %v693
    %v696 = vunpack.c.l.s4 1966171168
    %v697 = vunpack.c.0.s8 %v696
    %v698 = vlaneseq
    %v699 = vshrl.u32 %v698, 7
    %v700 = vsub.s32 %v697, %v699
    %v701 = vrot.slane %v694, %v700
    %s703 = scalar_lea.vmem [#allocation2], 5
    %704 = vst.msk [vmem:[%s703] ss:$8 sm:$0x3] %vm598, %v701
    %705 = vst.msk [vmem:[%s703] ss:$8 sm:$0x0] %vm598, %v701
    %v708 = vcombine.low %v527, %v528
    %v710 = vunpack.c.l.s4 1966171168
    %v711 = vunpack.c.0.s8 %v710
    %v712 = vlaneseq
    %v713 = vshrl.u32 %v712, 7
    %v714 = vsub.s32 %v711, %v713
    %v715 = vrot.slane %v708, %v714
    %v716 = vcombine.high %v715, %v715
    %v718 = vunpack.c.l.s4 1966171168
    %v719 = vunpack.c.0.s8 %v718
    %v720 = vlaneseq
    %v721 = vshrl.u32 %v720, 7
    %v722 = vsub.s32 %v719, %v721
    %v723 = vrot.slane %v716, %v722
    %s725 = scalar_lea.vmem [#allocation2], 6
    %726 = vst.msk [vmem:[%s725] ss:$8 sm:$0x3] %vm598, %v723
    %727 = vst.msk [vmem:[%s725] ss:$8 sm:$0x0] %vm598, %v723
    %v730 = vcombine.low %v529, %v530
    %v732 = vunpack.c.l.s4 1966171168
    %v733 = vunpack.c.0.s8 %v732
    %v734 = vlaneseq
    %v735 = vshrl.u32 %v734, 7
    %v736 = vsub.s32 %v733, %v735
    %v737 = vrot.slane %v730, %v736
    %v739 = vunpack.c.l.s4 1966171168
    %v740 = vunpack.c.0.s8 %v739
    %v741 = vlaneseq
    %v742 = vshrl.u32 %v741, 7
    %v743 = vsub.s32 %v740, %v742
    %v744 = vrot.slane %v737, %v743
    %s746 = scalar_lea.vmem [#allocation2], 7
    %747 = vst.msk [vmem:[%s746] ss:$8 sm:$0x3] %vm598, %v744
    %748 = vst.msk [vmem:[%s746] ss:$8 sm:$0x0] %vm598, %v744
    %v751 = vcombine.low %v575, %v576
    %v753 = vunpack.c.l.s4 1966171168
    %v754 = vunpack.c.0.s8 %v753
    %v755 = vlaneseq
    %v756 = vshrl.u32 %v755, 7
    %v757 = vsub.s32 %v754, %v756
    %v758 = vrot.slane %v751, %v757
    %v760 = vunpack.c.l.s4 1966171168
    %v761 = vunpack.c.0.s8 %v760
    %v762 = vlaneseq
    %v763 = vshrl.u32 %v762, 7
    %v764 = vsub.s32 %v761, %v763
    %v765 = vrot.slane %v758, %v764
    %s767 = scalar_lea.vmem [#allocation2], 16
    %768 = vst.msk [vmem:[%s767] ss:$8 sm:$0x3] %vm598, %v765
    %769 = vst.msk [vmem:[%s767] ss:$8 sm:$0x0] %vm598, %v765
    %v770 = vld [vmem:[#allocation2] sm:$0xff]
    %v771 = vld [vmem:[#allocation2 + $0x8] sm:$0xff]
    %v772 = vld [vmem:[#allocation2 + $0x10] sm:$0x1]
    %v773 = vld [vmem:[#allocation2 + $0x18] sm:$0x1]
    %v774 = vadd.f32 %v770, %v771
    %775 = vadd.xlane.f32.xlu0 %v774
    %v776 = vpop.xlane.xlu0 %775
    %vm777 = vcmask 1040384
    %v778 = vsel %vm777, %v772, 0.0
    %v779 = vsel %vm777, %v773, 0.0
    %v780 = vadd.f32 %v778, %v779
    %781 = vadd.xlane.f32.xlu0 %v780
    %v782 = vpop.xlane.xlu0 %781
    %783 = vst [vmem:[#allocation3] sm:$0xff] %v776
    %784 = vst [vmem:[#allocation3 + $0x8] sm:$0x1] %v782
    // Predicated region
    $region14: #{tpu_custom_call.1} parent=1 // pred_check
      _
    $region15: #{tpu_custom_call.1} parent=1 // pred_check_branch
      %786 = sbr.rel (0) target = $region17
    $region16: #{tpu_custom_call.1} parent=1 // pred_region
      %s788 = ssub.s32 256, 256
      %789 = vsyncadd [#allocation4], %s788
      %s790 = sshll.u32 [#allocation3], 4
      %s791 = int_to_ptr.vmem [resolvable:$true] %s790
      %796 = dma.vmem_to_hbm [thread:$0]  %s791, 256, %s3, [#allocation4], 128, 128, 8
    $region17: #{tpu_custom_call.1} parent=1 // pred_fallthru
      _
    // Predicated region
    $region18: #{tpu_custom_call.1} parent=1 // pred_check
      _
    $region19: #{tpu_custom_call.1} parent=1 // pred_check_branch
      %798 = sbr.rel (0) target = $region21
    $region20: #{tpu_custom_call.1} parent=1 // pred_region
      %799 = dma.done [#allocation4], 256
    $region21: #{tpu_custom_call.1} parent=1 // pred_fallthru
      _
    %800 = vsyncpa [#allocation4], 1

</llo_original>
